<compile_context>
chip_gen: v6e
topology: v6e:2x2x1
jax: 0.10.0
libtpu: 0.0.40
codegen_flags: <defaults>
</compile_context>

<pallas_src>
import functools

import jax
import jax.numpy as jnp
from jax import lax
from jax.experimental import pallas as pl
from jax.experimental.pallas import tpu as pltpu


_LANES = 128                 # vreg / MXU lane width; all K heads packed here
_MXU_DTYPE = jnp.bfloat16    # MXU operand dtype (f32 accumulation in-kernel)


def _round_up(x, m):
    return ((x + m - 1) // m) * m


def _pick_d_tiling(d):
    """Reduction (D) tile + padded extent.  TD is lane-aligned so the x block
    (TB, TD) and the W block (TD, 128) both satisfy the (8, 128) constraint."""
    td = min(2048, _round_up(d, _LANES))
    d_pad = _round_up(d, td)
    return td, d_pad


def _pick_b_tiling(b):
    """Batch tile: >= 2 grid steps whenever B > 8 (v7x megacore), capped at
    512 rows (~85% of HBM roofline per the tile-size sweep), sublane aligned."""
    if b <= 8:
        tb = 8
    elif b < 128:
        tb = _round_up((b + 1) // 2, 8)
    else:
        tb = min(512, _round_up((b + 1) // 2, 64))
    return tb, _round_up(b, tb)


def prepare_ensemble_params(weights, biases):
    """One-time (init-time) fusion of the K component heads.

    weights: [K, D, NC] f32, biases: [K, NC] f32.
    Returns (w_fused [D_pad, 128] bf16, b_fused [1, 128] f32).  Component k
    occupies lanes [k*NC, (k+1)*NC); padding lanes get zero weights and -1e30
    bias so they produce exactly-0 probabilities.  Hoisted out of the forward
    path so the pad/transpose relayout is paid once, not per call.
    """
    k, d, nc = weights.shape
    assert k * nc <= _LANES, "dense packing assumes K*NC <= 128 lanes"
    _, d_pad = _pick_d_tiling(d)

    wt = jnp.transpose(weights, (1, 0, 2)).reshape(d, k * nc)       # [D, K*NC]
    w_fused = jnp.zeros((d_pad, _LANES), _MXU_DTYPE)
    w_fused = w_fused.at[:d, :k * nc].set(wt.astype(_MXU_DTYPE))

    b_fused = jnp.full((1, _LANES), -1e30, jnp.float32)
    b_fused = b_fused.at[0, :k * nc].set(
        biases.reshape(k * nc).astype(jnp.float32))
    return w_fused, b_fused


def _ensemble_kernel(x_ref, w_ref, b_ref, o_ref, acc_ref, *,
                     nc, num_k, row_chunk):
    # x_ref:   (TB, TD)    bf16  batch x reduction tile of flattened inputs
    # w_ref:   (TD, 128)   bf16  fused weight tile (all K heads densely packed)
    # b_ref:   (1, 128)    f32   fused bias (-1e30 in padding lanes)
    # o_ref:   (TB, 128)   f32   per-component softmax probabilities
    # acc_ref: (TB, 128)   f32   VMEM accumulator over the D grid axis
    j = pl.program_id(1)

    @pl.when(j == 0)
    def _init():
        acc_ref[...] = jnp.zeros_like(acc_ref)

    # One MXU matmul per (batch, D) tile for the whole ensemble, f32 accumulate.
    acc_ref[...] += jnp.dot(x_ref[...], w_ref[...],
                            preferred_element_type=jnp.float32)

    @pl.when(j == pl.num_programs(1) - 1)
    def _finalize():
        bias = b_ref[...]                                   # (1, 128)
        tb = acc_ref.shape[0]
        neg = jnp.float32(-1e30)
        lane = lax.broadcasted_iota(jnp.int32, (row_chunk, _LANES), 1)
        # Row-chunked, lane-masked (segmented) softmax: static aligned slices
        # only; chunking keeps each chunk's f32 working set inside the 64-vreg
        # file (matters on v5e's single vector-store slot).
        for c in range(tb // row_chunk):                    # static unroll
            r0, r1 = c * row_chunk, (c + 1) * row_chunk
            lg = acc_ref[r0:r1, :] + bias                   # (rows, 128)
            m_b = jnp.zeros_like(lg)
            for k in range(num_k):                          # K is tiny, static
                mask = (lane >= k * nc) & (lane < (k + 1) * nc)
                m_k = jnp.max(jnp.where(mask, lg, neg), axis=-1, keepdims=True)
                m_b = jnp.where(mask, m_k, m_b)
            e = jnp.exp(lg - m_b)                           # pad lanes: exp(-1e30)==0
            d_b = jnp.ones_like(lg)                         # 1 on pad lanes (no 0-div)
            for k in range(num_k):
                mask = (lane >= k * nc) & (lane < (k + 1) * nc)
                d_k = jnp.sum(jnp.where(mask, e, 0.0), axis=-1, keepdims=True)
                d_b = jnp.where(mask, d_k, d_b)
            probs = e * pl.reciprocal(d_b, approx=True)     # EUP vrcp (free slot)
            o_ref[r0:r1, :] = probs.astype(o_ref.dtype)


def classifier_ensemble(x_nchw, w_fused, b_fused, num_components, num_classes):
    """Forward pass: [B, C, H, W] -> [B, K, NC], matching
    torch.stack([softmax(flatten(x) @ W_k + b_k) for k in range(K)], dim=1)."""
    B = x_nchw.shape[0]
    D = x_nchw.size // B

    TD, D_pad = _pick_d_tiling(D)
    assert w_fused.shape == (D_pad, _LANES), (w_fused.shape, D_pad)
    TB, B_pad = _pick_b_tiling(B)
    row_chunk = next(rc for rc in (64, 32, 16, 8) if TB % rc == 0)

    # Same flatten as torch; zero-pad batch to a tile multiple (unmasked
    # sublane stores, pipelining, >=2 batch grid steps) and D to a TD multiple
    # (zero rows/cols contribute nothing to the matmul).
    x_flat = x_nchw.reshape(B, D).astype(_MXU_DTYPE)
    if (B_pad, D_pad) != (B, D):
        x_flat = jnp.pad(x_flat, ((0, B_pad - B), (0, D_pad - D)))

    grid = (B_pad // TB, D_pad // TD)
    kernel = functools.partial(_ensemble_kernel, nc=num_classes,
                               num_k=num_components, row_chunk=row_chunk)

    # Double-buffered x/W tiles + double-buffered out + f32 acc + headroom.
    vmem_bytes = (2 * TB * TD * 2 + 2 * TD * _LANES * 2
                  + 2 * TB * _LANES * 4 + TB * _LANES * 4 + (8 << 20))

    out = pl.pallas_call(
        kernel,
        out_shape=jax.ShapeDtypeStruct((B_pad, _LANES), jnp.float32),
        grid_spec=pltpu.PrefetchScalarGridSpec(
            num_scalar_prefetch=0,
            grid=grid,
            in_specs=[
                pl.BlockSpec((TB, TD), lambda i, j: (i, j)),       # x tile
                pl.BlockSpec((TD, _LANES), lambda i, j: (j, 0)),   # fused W tile
                # Bias is grid-invariant and only 512 B, so the default
                # double-buffer costs nothing worth a pipeline_mode override.
                pl.BlockSpec((1, _LANES), lambda i, j: (0, 0)),    # fused bias
            ],
            out_specs=pl.BlockSpec((TB, _LANES), lambda i, j: (i, 0)),
            scratch_shapes=[pltpu.VMEM((TB, _LANES), jnp.float32)],
        ),
        compiler_params=pltpu.CompilerParams(
            dimension_semantics=("parallel", "arbitrary"),
            vmem_limit_bytes=int(vmem_bytes)),
    )(x_flat, w_fused, b_fused)

    knc = num_components * num_classes
    return out[:B, :knc].reshape(B, num_components, num_classes)


def _reference(x_nchw, weights, biases):
    B = x_nchw.shape[0]
    K, D, NC = weights.shape
    x_flat = x_nchw.reshape(B, D)
    outs = []
    for k in range(K):
        logits = x_flat @ weights[k] + biases[k]
        outs.append(jax.nn.softmax(logits, axis=-1))
    return jnp.stack(outs, axis=1)


if __name__ == "__main__":
    key = jax.random.PRNGKey(0)
    B, C, H, W = 2, 4, 16, 16          # small NCHW input
    K, NC = 3, 10                      # 3 component classifiers, 10 classes
    D = C * H * W

    kx, kw, kb = jax.random.split(key, 3)
    x = jax.random.normal(kx, (B, C, H, W), dtype=jnp.float32)
    weights = 0.02 * jax.random.normal(kw, (K, D, NC), dtype=jnp.float32)
    biases = 0.01 * jax.random.normal(kb, (K, NC), dtype=jnp.float32)

    # One-time parameter fusion (init-time; hoisted out of the forward path).
    w_fused, b_fused = prepare_ensemble_params(weights, biases)

    out = classifier_ensemble(x, w_fused, b_fused, K, NC)
    out = jax.block_until_ready(out)

    ref = _reference(x, weights, biases)
    assert out.shape == (B, K, NC), out.shape
    # bf16 MXU inputs + approx reciprocal -> relaxed tolerance vs f32 reference.
    assert jnp.allclose(out, ref, atol=1e-2, rtol=1e-2), "mismatch vs reference"
    # Each component's probabilities must still sum to ~1 (approx vrcp ~2e-4).
    assert jnp.allclose(out.sum(-1), 1.0, atol=3e-3), "softmax rows don't sum to 1"

    print("KERNEL_OK")
</pallas_src>

<mosaic_0001>
module attributes {stable_mosaic.version = 11 : i64} {
  func.func @_ensemble_kernel(%arg0: i32, %arg1: i32, %arg2: memref<8x1024xbf16, #tpu.memory_space<vmem>>, %arg3: memref<1024x128xbf16, #tpu.memory_space<vmem>>, %arg4: memref<1x128xf32, #tpu.memory_space<vmem>>, %arg5: memref<8x128xf32, #tpu.memory_space<vmem>>, %arg6: memref<8x128xf32, #tpu.memory_space<vmem>>) attributes {dimension_semantics = [#tpu.dimension_semantics<parallel>, #tpu.dimension_semantics<arbitrary>], iteration_bounds = array<i64: 1, 1>, scalar_prefetch = 0 : i64, scratch_operands = 1 : i64, tpu.core_type = #tpu.core_type<tc>, window_params = [{transform_indices = @transform_0, window_bounds = array<i64: 8, 1024>}, {transform_indices = @transform_1, window_bounds = array<i64: 1024, 128>}, {pipeline_mode = #tpu.pipeline_mode<synchronous>, transform_indices = @transform_2, window_bounds = array<i64: 1, 128>}, {transform_indices = @transform_3, window_bounds = array<i64: 8, 128>}]} {
    %c0_i32 = arith.constant 0 : i32
    %0 = arith.cmpi eq, %arg1, %c0_i32 : i32
    %1 = arith.extui %0 : i1 to i32
    %c0_i32_0 = arith.constant 0 : i32
    %2 = arith.cmpi ne, %1, %c0_i32_0 : i32
    scf.if %2 {
      %cst_10 = arith.constant 0.000000e+00 : f32
      %12 = vector.broadcast %cst_10 : f32 to vector<8x128xf32>
      %c0_11 = arith.constant 0 : index
      %c0_12 = arith.constant 0 : index
      %13 = vector.load %arg6[%c0_11, %c0_12] : memref<8x128xf32, #tpu.memory_space<vmem>>, vector<8x128xf32>
      tpu.vector_store %arg6[%c0_11, %c0_12], %12 {strides = array<i32>} : memref<8x128xf32, #tpu.memory_space<vmem>>, vector<8x128xf32>,
    } else {
    }
    %c0 = arith.constant 0 : index
    %c0_1 = arith.constant 0 : index
    %3 = vector.load %arg6[%c0, %c0_1] : memref<8x128xf32, #tpu.memory_space<vmem>>, vector<8x128xf32>
    %c0_2 = arith.constant 0 : index
    %c0_3 = arith.constant 0 : index
    %4 = vector.load %arg2[%c0_2, %c0_3] : memref<8x1024xbf16, #tpu.memory_space<vmem>>, vector<8x1024xbf16>
    %c0_4 = arith.constant 0 : index
    %c0_5 = arith.constant 0 : index
    %5 = vector.load %arg3[%c0_4, %c0_5] : memref<1024x128xbf16, #tpu.memory_space<vmem>>, vector<1024x128xbf16>
    %cst = arith.constant dense<0.000000e+00> : vector<8x128xf32>
    %6 = tpu.matmul %4, %5, %cst {dimension_numbers = #tpu.dot_dimension_numbers<[1], [0], [0], [1], [0, 0, 1, 1], [], []>} : vector<8x1024xbf16>, vector<1024x128xbf16>, vector<8x128xf32> -> vector<8x128xf32>
    %7 = arith.addf %3, %6 : vector<8x128xf32>
    %c0_6 = arith.constant 0 : index
    %c0_7 = arith.constant 0 : index
    %8 = vector.load %arg6[%c0_6, %c0_7] : memref<8x128xf32, #tpu.memory_space<vmem>>, vector<8x128xf32>
    tpu.vector_store %arg6[%c0_6, %c0_7], %7 {strides = array<i32>} : memref<8x128xf32, #tpu.memory_space<vmem>>, vector<8x128xf32>,
    %c0_i32_8 = arith.constant 0 : i32
    %9 = arith.cmpi eq, %arg1, %c0_i32_8 : i32
    %10 = arith.extui %9 : i1 to i32
    %c0_i32_9 = arith.constant 0 : i32
    %11 = arith.cmpi ne, %10, %c0_i32_9 : i32
    scf.if %11 {
      %c0_10 = arith.constant 0 : index
      %c0_11 = arith.constant 0 : index
      %12 = vector.load %arg4[%c0_10, %c0_11] : memref<1x128xf32, #tpu.memory_space<vmem>>, vector<1x128xf32>
      %13 = tpu.iota {dimensions = array<i32: 1>} : vector<8x128xi32>
      %c0_12 = arith.constant 0 : index
      %c0_13 = arith.constant 0 : index
      %14 = vector.load %arg6[%c0_12, %c0_13] : memref<8x128xf32, #tpu.memory_space<vmem>>, vector<8x128xf32>
      %15 = vector.broadcast %12 : vector<1x128xf32> to vector<8x128xf32>
      %16 = arith.addf %14, %15 : vector<8x128xf32>
      %cst_14 = arith.constant 0.000000e+00 : f32
      %17 = vector.broadcast %cst_14 : f32 to vector<8x128xf32>
      %c0_i32_15 = arith.constant 0 : i32
      %18 = vector.broadcast %c0_i32_15 : i32 to vector<8x128xi32>
      %19 = arith.cmpi sge, %13, %18 : vector<8x128xi32>
      %c10_i32 = arith.constant 10 : i32
      %20 = vector.broadcast %c10_i32 : i32 to vector<8x128xi32>
      %21 = arith.cmpi slt, %13, %20 : vector<8x128xi32>
      %22 = arith.andi %19, %21 : vector<8x128xi1>
      %cst_16 = arith.constant -1.000000e+30 : f32
      %23 = vector.broadcast %cst_16 : f32 to vector<8x128xf32>
      %24 = arith.select %22, %16, %23 : vector<8x128xi1>, vector<8x128xf32>
      %cst_17 = arith.constant dense<0xFF800000> : vector<8xf32>
      %25 = vector.multi_reduction <maximumf>, %24, %cst_17 [1] : vector<8x128xf32> to vector<8xf32>
      %26 = vector.shape_cast %25 : vector<8xf32> to vector<8x1xf32>
      %27 = vector.shape_cast %26 : vector<8x1xf32> to vector<8x1xf32>
      %28 = vector.broadcast %27 : vector<8x1xf32> to vector<8x128xf32>
      %29 = arith.select %22, %28, %17 : vector<8x128xi1>, vector<8x128xf32>
      %c10_i32_18 = arith.constant 10 : i32
      %30 = vector.broadcast %c10_i32_18 : i32 to vector<8x128xi32>
      %31 = arith.cmpi sge, %13, %30 : vector<8x128xi32>
      %c20_i32 = arith.constant 20 : i32
      %32 = vector.broadcast %c20_i32 : i32 to vector<8x128xi32>
      %33 = arith.cmpi slt, %13, %32 : vector<8x128xi32>
      %34 = arith.andi %31, %33 : vector<8x128xi1>
      %cst_19 = arith.constant -1.000000e+30 : f32
      %35 = vector.broadcast %cst_19 : f32 to vector<8x128xf32>
      %36 = arith.select %34, %16, %35 : vector<8x128xi1>, vector<8x128xf32>
      %cst_20 = arith.constant dense<0xFF800000> : vector<8xf32>
      %37 = vector.multi_reduction <maximumf>, %36, %cst_20 [1] : vector<8x128xf32> to vector<8xf32>
      %38 = vector.shape_cast %37 : vector<8xf32> to vector<8x1xf32>
      %39 = vector.shape_cast %38 : vector<8x1xf32> to vector<8x1xf32>
      %40 = vector.broadcast %39 : vector<8x1xf32> to vector<8x128xf32>
      %41 = arith.select %34, %40, %29 : vector<8x128xi1>, vector<8x128xf32>
      %c20_i32_21 = arith.constant 20 : i32
      %42 = vector.broadcast %c20_i32_21 : i32 to vector<8x128xi32>
      %43 = arith.cmpi sge, %13, %42 : vector<8x128xi32>
      %c30_i32 = arith.constant 30 : i32
      %44 = vector.broadcast %c30_i32 : i32 to vector<8x128xi32>
      %45 = arith.cmpi slt, %13, %44 : vector<8x128xi32>
      %46 = arith.andi %43, %45 : vector<8x128xi1>
      %cst_22 = arith.constant -1.000000e+30 : f32
      %47 = vector.broadcast %cst_22 : f32 to vector<8x128xf32>
      %48 = arith.select %46, %16, %47 : vector<8x128xi1>, vector<8x128xf32>
      %cst_23 = arith.constant dense<0xFF800000> : vector<8xf32>
      %49 = vector.multi_reduction <maximumf>, %48, %cst_23 [1] : vector<8x128xf32> to vector<8xf32>
      %50 = vector.shape_cast %49 : vector<8xf32> to vector<8x1xf32>
      %51 = vector.shape_cast %50 : vector<8x1xf32> to vector<8x1xf32>
      %52 = vector.broadcast %51 : vector<8x1xf32> to vector<8x128xf32>
      %53 = arith.select %46, %52, %41 : vector<8x128xi1>, vector<8x128xf32>
      %54 = arith.subf %16, %53 : vector<8x128xf32>
      %55 = math.exp %54 : vector<8x128xf32>
      %cst_24 = arith.constant 1.000000e+00 : f32
      %56 = vector.broadcast %cst_24 : f32 to vector<8x128xf32>
      %c0_i32_25 = arith.constant 0 : i32
      %57 = vector.broadcast %c0_i32_25 : i32 to vector<8x128xi32>
      %58 = arith.cmpi sge, %13, %57 : vector<8x128xi32>
      %c10_i32_26 = arith.constant 10 : i32
      %59 = vector.broadcast %c10_i32_26 : i32 to vector<8x128xi32>
      %60 = arith.cmpi slt, %13, %59 : vector<8x128xi32>
      %61 = arith.andi %58, %60 : vector<8x128xi1>
      %cst_27 = arith.constant 0.000000e+00 : f32
      %62 = vector.broadcast %cst_27 : f32 to vector<8x128xf32>
      %63 = arith.select %61, %55, %62 : vector<8x128xi1>, vector<8x128xf32>
      %cst_28 = arith.constant dense<0.000000e+00> : vector<8xf32>
      %64 = vector.multi_reduction <add>, %63, %cst_28 [1] : vector<8x128xf32> to vector<8xf32>
      %65 = vector.shape_cast %64 : vector<8xf32> to vector<8x1xf32>
      %66 = vector.shape_cast %65 : vector<8x1xf32> to vector<8x1xf32>
      %67 = vector.broadcast %66 : vector<8x1xf32> to vector<8x128xf32>
      %68 = arith.select %61, %67, %56 : vector<8x128xi1>, vector<8x128xf32>
      %c10_i32_29 = arith.constant 10 : i32
      %69 = vector.broadcast %c10_i32_29 : i32 to vector<8x128xi32>
      %70 = arith.cmpi sge, %13, %69 : vector<8x128xi32>
      %c20_i32_30 = arith.constant 20 : i32
      %71 = vector.broadcast %c20_i32_30 : i32 to vector<8x128xi32>
      %72 = arith.cmpi slt, %13, %71 : vector<8x128xi32>
      %73 = arith.andi %70, %72 : vector<8x128xi1>
      %cst_31 = arith.constant 0.000000e+00 : f32
      %74 = vector.broadcast %cst_31 : f32 to vector<8x128xf32>
      %75 = arith.select %73, %55, %74 : vector<8x128xi1>, vector<8x128xf32>
      %cst_32 = arith.constant dense<0.000000e+00> : vector<8xf32>
      %76 = vector.multi_reduction <add>, %75, %cst_32 [1] : vector<8x128xf32> to vector<8xf32>
      %77 = vector.shape_cast %76 : vector<8xf32> to vector<8x1xf32>
      %78 = vector.shape_cast %77 : vector<8x1xf32> to vector<8x1xf32>
      %79 = vector.broadcast %78 : vector<8x1xf32> to vector<8x128xf32>
      %80 = arith.select %73, %79, %68 : vector<8x128xi1>, vector<8x128xf32>
      %c20_i32_33 = arith.constant 20 : i32
      %81 = vector.broadcast %c20_i32_33 : i32 to vector<8x128xi32>
      %82 = arith.cmpi sge, %13, %81 : vector<8x128xi32>
      %c30_i32_34 = arith.constant 30 : i32
      %83 = vector.broadcast %c30_i32_34 : i32 to vector<8x128xi32>
      %84 = arith.cmpi slt, %13, %83 : vector<8x128xi32>
      %85 = arith.andi %82, %84 : vector<8x128xi1>
      %cst_35 = arith.constant 0.000000e+00 : f32
      %86 = vector.broadcast %cst_35 : f32 to vector<8x128xf32>
      %87 = arith.select %85, %55, %86 : vector<8x128xi1>, vector<8x128xf32>
      %cst_36 = arith.constant dense<0.000000e+00> : vector<8xf32>
      %88 = vector.multi_reduction <add>, %87, %cst_36 [1] : vector<8x128xf32> to vector<8xf32>
      %89 = vector.shape_cast %88 : vector<8xf32> to vector<8x1xf32>
      %90 = vector.shape_cast %89 : vector<8x1xf32> to vector<8x1xf32>
      %91 = vector.broadcast %90 : vector<8x1xf32> to vector<8x128xf32>
      %92 = arith.select %85, %91, %80 : vector<8x128xi1>, vector<8x128xf32>
      %93 = tpu.reciprocal %92 {approx = true} : vector<8x128xf32> -> vector<8x128xf32>
      %94 = arith.mulf %55, %93 : vector<8x128xf32>
      %c0_37 = arith.constant 0 : index
      %c0_38 = arith.constant 0 : index
      %95 = vector.load %arg5[%c0_37, %c0_38] : memref<8x128xf32, #tpu.memory_space<vmem>>, vector<8x128xf32>
      tpu.vector_store %arg5[%c0_37, %c0_38], %94 {strides = array<i32>} : memref<8x128xf32, #tpu.memory_space<vmem>>, vector<8x128xf32>,
    } else {
    }
    return
  }
  func.func @transform_0(%arg0: i32, %arg1: i32) -> (i32, i32) {
    %c0_i32 = arith.constant 0 : i32
    return %arg0, %arg1 : i32, i32
  }
  func.func @transform_1(%arg0: i32, %arg1: i32) -> (i32, i32) {
    %c0_i32 = arith.constant 0 : i32
    %c0_i32_0 = arith.constant 0 : i32
    return %arg1, %c0_i32 : i32, i32
  }
  func.func @transform_2(%arg0: i32, %arg1: i32) -> (i32, i32) {
    %c0_i32 = arith.constant 0 : i32
    %c0_i32_0 = arith.constant 0 : i32
    %c0_i32_1 = arith.constant 0 : i32
    return %c0_i32, %c0_i32_0 : i32, i32
  }
  func.func @transform_3(%arg0: i32, %arg1: i32) -> (i32, i32) {
    %c0_i32 = arith.constant 0 : i32
    %c0_i32_0 = arith.constant 0 : i32
    return %arg0, %c0_i32 : i32, i32
  }
}

</mosaic_0001>

<llo_original>
// kernel: tpu_custom_call.1
$region0: #{tpu_custom_call.1}
  #allocation0 [shape = 'u32[]', space=smem, size = 0x4, offset = 0x4, fixed_abs, tag = 'smem constant byte address 0x4 - core index']
  #allocation1 [shape = 'u32[144,128]{1,0:T(1,128)}', space=vmem, size = 0x12000, scoped, tag = 'internal scratch']
  #allocation2 [shape = 'f32[8,128]{1,0:T(8,128)}', space=vmem, size = 0x1000, scoped, tag = 'scratch operand']
  %s0 = inlined_call_operand.hbm [shape: bf16[8,1024], index: 0, kind: input, shape index: {}]
  %s1 = inlined_call_operand.hbm [shape: bf16[1024,128], index: 1, kind: input, shape index: {}]
  %s2 = inlined_call_operand.vmem [shape: f32[1,128], index: 2, kind: input, shape index: {}]
  %s3 = inlined_call_operand.hbm [shape: f32[8,128], index: 3, kind: output, shape index: {}]
  %s4 = sld [smem:[#allocation0]]
  $region38: #{tpu_custom_call.1} parent=0
    _
  %s6 = ssub.s32 1, %s4
  %s7 = scalar_select 0, %s6, %s4
  $region1: #{tpu_custom_call.1} parent=0
    #allocation3 [shape = 'u8[16384]{0}', space=vmem, size = 0x4000, scoped, tag = 'input window, operand 0, single buffered']
    #allocation4 [shape = 's32[1]{0}', space=sflag, size = 0x4, scoped, tag = 'scoped memory for tpu_custom_call.1']
    #allocation5 [shape = 's32[1]{0}', space=sflag, size = 0x4, scoped, tag = 'scoped memory for tpu_custom_call.1']
    #allocation6 [shape = 'u8[262144]{0}', space=vmem, size = 0x40000, scoped, tag = 'input window, operand 1, single buffered']
    #allocation7 [shape = 's32[1]{0}', space=sflag, size = 0x4, scoped, tag = 'scoped memory for tpu_custom_call.1']
    #allocation8 [shape = 'u8[4096]{0}', space=vmem, size = 0x1000, scoped, tag = 'output window, operand 0, single buffered']
    %8 = vsyncpa [#allocation4], 0
    %9 = vsyncpa [#allocation7], 0
    %10 = vsyncpa [#allocation5], 0
    // Predicated region
    $region2: #{tpu_custom_call.1} parent=1 // pred_check
      _
    $region3: #{tpu_custom_call.1} parent=1 // pred_check_branch
      %12 = sbr.rel (0) target = $region5
    $region4: #{tpu_custom_call.1} parent=1 // pred_region
      %s14 = ssub.s32 512, 512
      %15 = vsyncadd [#allocation4], %s14
      %s17 = sshll.u32 [#allocation3], 4
      %s18 = int_to_ptr.vmem [resolvable:$true] %s17
      %20 = dma.hbm_to_vmem [thread:$0]  %s0, 512, %s18, [#allocation4]
    $region5: #{tpu_custom_call.1} parent=1 // pred_fallthru
      _
    // Predicated region
    $region6: #{tpu_custom_call.1} parent=1 // pred_check
      _
    $region7: #{tpu_custom_call.1} parent=1 // pred_check_branch
      %22 = sbr.rel (0) target = $region9
    $region8: #{tpu_custom_call.1} parent=1 // pred_region
      %s24 = ssub.s32 8192, 8192
      %25 = vsyncadd [#allocation7], %s24
      %s26 = sshll.u32 [#allocation6], 4
      %s27 = int_to_ptr.vmem [resolvable:$true] %s26
      %32 = dma.hbm_to_vmem [thread:$0]  %s1, 8192, %s27, [#allocation7], 64, 64, 4
    $region9: #{tpu_custom_call.1} parent=1 // pred_fallthru
      _
    // Predicated region
    $region10: #{tpu_custom_call.1} parent=1 // pred_check
      _
    $region11: #{tpu_custom_call.1} parent=1 // pred_check_branch
      %34 = sbr.rel (0) target = $region13
    $region12: #{tpu_custom_call.1} parent=1 // pred_region
      _
    $region13: #{tpu_custom_call.1} parent=1 // pred_fallthru
      _
    // Predicated region
    $region14: #{tpu_custom_call.1} parent=1 // pred_check
      _
    $region15: #{tpu_custom_call.1} parent=1 // pred_check_branch
      %36 = sbr.rel (0) target = $region17
    $region16: #{tpu_custom_call.1} parent=1 // pred_region
      %37 = dma.done [#allocation4], 512
    $region17: #{tpu_custom_call.1} parent=1 // pred_fallthru
      _
    // Predicated region
    $region18: #{tpu_custom_call.1} parent=1 // pred_check
      _
    $region19: #{tpu_custom_call.1} parent=1 // pred_check_branch
      %39 = sbr.rel (0) target = $region21
    $region20: #{tpu_custom_call.1} parent=1 // pred_region
      %40 = dma.done [#allocation7], 8192
    $region21: #{tpu_custom_call.1} parent=1 // pred_fallthru
      _
    %p42 = scmp.eq.s32.totalorder 0, 0
    // Predicated region
    $region22: #{tpu_custom_call.1} parent=1 // pred_check
      %p43 = pneg %p42
    $region23: #{tpu_custom_call.1} parent=1 // pred_check_branch
      %45 = sbr.rel (%p43) target = $region25
    $region24: #{tpu_custom_call.1} parent=1 // pred_region
      %46 = vst [vmem:[#allocation2] sm:$0xff] 0.0
    $region25: #{tpu_custom_call.1} parent=1 // pred_fallthru
      _
    %v47 = vld [vmem:[#allocation2] sm:$0xff]
    %v48 = vld [vmem:[#allocation3] sm:$0xff]
    %v49 = vld [vmem:[#allocation3 + $0x8] sm:$0xff]
    %v50 = vld [vmem:[#allocation3 + $0x10] sm:$0xff]
    %v51 = vld [vmem:[#allocation3 + $0x18] sm:$0xff]
    %v52 = vld [vmem:[#allocation6] sm:$0xf]
    %v53 = vld [vmem:[#allocation6 + $0x4] sm:$0xf]
    %v54 = vld [vmem:[#allocation6 + $0x8] sm:$0xf]
    %v55 = vld [vmem:[#allocation6 + $0xc] sm:$0xf]
    %v56 = vld [vmem:[#allocation6 + $0x10] sm:$0xf]
    %v57 = vld [vmem:[#allocation6 + $0x14] sm:$0xf]
    %v58 = vld [vmem:[#allocation6 + $0x18] sm:$0xf]
    %v59 = vld [vmem:[#allocation6 + $0x1c] sm:$0xf]
    %v60 = vld [vmem:[#allocation6 + $0x20] sm:$0xf]
    %v61 = vld [vmem:[#allocation6 + $0x24] sm:$0xf]
    %v62 = vld [vmem:[#allocation6 + $0x28] sm:$0xf]
    %v63 = vld [vmem:[#allocation6 + $0x2c] sm:$0xf]
    %v64 = vld [vmem:[#allocation6 + $0x30] sm:$0xf]
    %v65 = vld [vmem:[#allocation6 + $0x34] sm:$0xf]
    %v66 = vld [vmem:[#allocation6 + $0x38] sm:$0xf]
    %v67 = vld [vmem:[#allocation6 + $0x3c] sm:$0xf]
    %v68 = vld [vmem:[#allocation6 + $0x40] sm:$0xf]
    %v69 = vld [vmem:[#allocation6 + $0x44] sm:$0xf]
    %v70 = vld [vmem:[#allocation6 + $0x48] sm:$0xf]
    %v71 = vld [vmem:[#allocation6 + $0x4c] sm:$0xf]
    %v72 = vld [vmem:[#allocation6 + $0x50] sm:$0xf]
    %v73 = vld [vmem:[#allocation6 + $0x54] sm:$0xf]
    %v74 = vld [vmem:[#allocation6 + $0x58] sm:$0xf]
    %v75 = vld [vmem:[#allocation6 + $0x5c] sm:$0xf]
    %v76 = vld [vmem:[#allocation6 + $0x60] sm:$0xf]
    %v77 = vld [vmem:[#allocation6 + $0x64] sm:$0xf]
    %v78 = vld [vmem:[#allocation6 + $0x68] sm:$0xf]
    %v79 = vld [vmem:[#allocation6 + $0x6c] sm:$0xf]
    %v80 = vld [vmem:[#allocation6 + $0x70] sm:$0xf]
    %v81 = vld [vmem:[#allocation6 + $0x74] sm:$0xf]
    %v82 = vld [vmem:[#allocation6 + $0x78] sm:$0xf]
    %v83 = vld [vmem:[#allocation6 + $0x7c] sm:$0xf]
    %v84 = vld [vmem:[#allocation6 + $0x80] sm:$0xf]
    %v85 = vld [vmem:[#allocation6 + $0x84] sm:$0xf]
    %v86 = vld [vmem:[#allocation6 + $0x88] sm:$0xf]
    %v87 = vld [vmem:[#allocation6 + $0x8c] sm:$0xf]
    %v88 = vld [vmem:[#allocation6 + $0x90] sm:$0xf]
    %v89 = vld [vmem:[#allocation6 + $0x94] sm:$0xf]
    %v90 = vld [vmem:[#allocation6 + $0x98] sm:$0xf]
    %v91 = vld [vmem:[#allocation6 + $0x9c] sm:$0xf]
    %v92 = vld [vmem:[#allocation6 + $0xa0] sm:$0xf]
    %v93 = vld [vmem:[#allocation6 + $0xa4] sm:$0xf]
    %v94 = vld [vmem:[#allocation6 + $0xa8] sm:$0xf]
    %v95 = vld [vmem:[#allocation6 + $0xac] sm:$0xf]
    %v96 = vld [vmem:[#allocation6 + $0xb0] sm:$0xf]
    %v97 = vld [vmem:[#allocation6 + $0xb4] sm:$0xf]
    %v98 = vld [vmem:[#allocation6 + $0xb8] sm:$0xf]
    %v99 = vld [vmem:[#allocation6 + $0xbc] sm:$0xf]
    %v100 = vld [vmem:[#allocation6 + $0xc0] sm:$0xf]
    %v101 = vld [vmem:[#allocation6 + $0xc4] sm:$0xf]
    %v102 = vld [vmem:[#allocation6 + $0xc8] sm:$0xf]
    %v103 = vld [vmem:[#allocation6 + $0xcc] sm:$0xf]
    %v104 = vld [vmem:[#allocation6 + $0xd0] sm:$0xf]
    %v105 = vld [vmem:[#allocation6 + $0xd4] sm:$0xf]
    %v106 = vld [vmem:[#allocation6 + $0xd8] sm:$0xf]
    %v107 = vld [vmem:[#allocation6 + $0xdc] sm:$0xf]
    %v108 = vld [vmem:[#allocation6 + $0xe0] sm:$0xf]
    %v109 = vld [vmem:[#allocation6 + $0xe4] sm:$0xf]
    %v110 = vld [vmem:[#allocation6 + $0xe8] sm:$0xf]
    %v111 = vld [vmem:[#allocation6 + $0xec] sm:$0xf]
    %v112 = vld [vmem:[#allocation6 + $0xf0] sm:$0xf]
    %v113 = vld [vmem:[#allocation6 + $0xf4] sm:$0xf]
    %v114 = vld [vmem:[#allocation6 + $0xf8] sm:$0xf]
    %v115 = vld [vmem:[#allocation6 + $0xfc] sm:$0xf]
    %v116 = vld [vmem:[#allocation6 + $0x100] sm:$0xf]
    %v117 = vld [vmem:[#allocation6 + $0x104] sm:$0xf]
    %v118 = vld [vmem:[#allocation6 + $0x108] sm:$0xf]
    %v119 = vld [vmem:[#allocation6 + $0x10c] sm:$0xf]
    %v120 = vld [vmem:[#allocation6 + $0x110] sm:$0xf]
    %v121 = vld [vmem:[#allocation6 + $0x114] sm:$0xf]
    %v122 = vld [vmem:[#allocation6 + $0x118] sm:$0xf]
    %v123 = vld [vmem:[#allocation6 + $0x11c] sm:$0xf]
    %v124 = vld [vmem:[#allocation6 + $0x120] sm:$0xf]
    %v125 = vld [vmem:[#allocation6 + $0x124] sm:$0xf]
    %v126 = vld [vmem:[#allocation6 + $0x128] sm:$0xf]
    %v127 = vld [vmem:[#allocation6 + $0x12c] sm:$0xf]
    %v128 = vld [vmem:[#allocation6 + $0x130] sm:$0xf]
    %v129 = vld [vmem:[#allocation6 + $0x134] sm:$0xf]
    %v130 = vld [vmem:[#allocation6 + $0x138] sm:$0xf]
    %v131 = vld [vmem:[#allocation6 + $0x13c] sm:$0xf]
    %v132 = vld [vmem:[#allocation6 + $0x140] sm:$0xf]
    %v133 = vld [vmem:[#allocation6 + $0x144] sm:$0xf]
    %v134 = vld [vmem:[#allocation6 + $0x148] sm:$0xf]
    %v135 = vld [vmem:[#allocation6 + $0x14c] sm:$0xf]
    %v136 = vld [vmem:[#allocation6 + $0x150] sm:$0xf]
    %v137 = vld [vmem:[#allocation6 + $0x154] sm:$0xf]
    %v138 = vld [vmem:[#allocation6 + $0x158] sm:$0xf]
    %v139 = vld [vmem:[#allocation6 + $0x15c] sm:$0xf]
    %v140 = vld [vmem:[#allocation6 + $0x160] sm:$0xf]
    %v141 = vld [vmem:[#allocation6 + $0x164] sm:$0xf]
    %v142 = vld [vmem:[#allocation6 + $0x168] sm:$0xf]
    %v143 = vld [vmem:[#allocation6 + $0x16c] sm:$0xf]
    %v144 = vld [vmem:[#allocation6 + $0x170] sm:$0xf]
    %v145 = vld [vmem:[#allocation6 + $0x174] sm:$0xf]
    %v146 = vld [vmem:[#allocation6 + $0x178] sm:$0xf]
    %v147 = vld [vmem:[#allocation6 + $0x17c] sm:$0xf]
    %v148 = vld [vmem:[#allocation6 + $0x180] sm:$0xf]
    %v149 = vld [vmem:[#allocation6 + $0x184] sm:$0xf]
    %v150 = vld [vmem:[#allocation6 + $0x188] sm:$0xf]
    %v151 = vld [vmem:[#allocation6 + $0x18c] sm:$0xf]
    %v152 = vld [vmem:[#allocation6 + $0x190] sm:$0xf]
    %v153 = vld [vmem:[#allocation6 + $0x194] sm:$0xf]
    %v154 = vld [vmem:[#allocation6 + $0x198] sm:$0xf]
    %v155 = vld [vmem:[#allocation6 + $0x19c] sm:$0xf]
    %v156 = vld [vmem:[#allocation6 + $0x1a0] sm:$0xf]
    %v157 = vld [vmem:[#allocation6 + $0x1a4] sm:$0xf]
    %v158 = vld [vmem:[#allocation6 + $0x1a8] sm:$0xf]
    %v159 = vld [vmem:[#allocation6 + $0x1ac] sm:$0xf]
    %v160 = vld [vmem:[#allocation6 + $0x1b0] sm:$0xf]
    %v161 = vld [vmem:[#allocation6 + $0x1b4] sm:$0xf]
    %v162 = vld [vmem:[#allocation6 + $0x1b8] sm:$0xf]
    %v163 = vld [vmem:[#allocation6 + $0x1bc] sm:$0xf]
    %v164 = vld [vmem:[#allocation6 + $0x1c0] sm:$0xf]
    %v165 = vld [vmem:[#allocation6 + $0x1c4] sm:$0xf]
    %v166 = vld [vmem:[#allocation6 + $0x1c8] sm:$0xf]
    %v167 = vld [vmem:[#allocation6 + $0x1cc] sm:$0xf]
    %v168 = vld [vmem:[#allocation6 + $0x1d0] sm:$0xf]
    %v169 = vld [vmem:[#allocation6 + $0x1d4] sm:$0xf]
    %v170 = vld [vmem:[#allocation6 + $0x1d8] sm:$0xf]
    %v171 = vld [vmem:[#allocation6 + $0x1dc] sm:$0xf]
    %v172 = vld [vmem:[#allocation6 + $0x1e0] sm:$0xf]
    %v173 = vld [vmem:[#allocation6 + $0x1e4] sm:$0xf]
    %v174 = vld [vmem:[#allocation6 + $0x1e8] sm:$0xf]
    %v175 = vld [vmem:[#allocation6 + $0x1ec] sm:$0xf]
    %v176 = vld [vmem:[#allocation6 + $0x1f0] sm:$0xf]
    %v177 = vld [vmem:[#allocation6 + $0x1f4] sm:$0xf]
    %v178 = vld [vmem:[#allocation6 + $0x1f8] sm:$0xf]
    %v179 = vld [vmem:[#allocation6 + $0x1fc] sm:$0xf]
    %v184 = vunpack.c.l.b16 %v48
    %v185 = vunpack.c.h.b16 %v48
    %v186 = vunpack.c.l.b16 %v49
    %v187 = vunpack.c.h.b16 %v49
    %v188 = vunpack.c.l.b16 %v50
    %v189 = vunpack.c.h.b16 %v50
    %v190 = vunpack.c.l.b16 %v51
    %v191 = vunpack.c.h.b16 %v51
    %v192 = vpack.c.b16 %v184, %v184
    %v193 = vpack.c.b16 %v185, %v185
    %v194 = vpack.c.b16 %v186, %v186
    %v195 = vpack.c.b16 %v187, %v187
    %v196 = vpack.c.b16 %v188, %v188
    %v197 = vpack.c.b16 %v189, %v189
    %v198 = vpack.c.b16 %v190, %v190
    %v199 = vpack.c.b16 %v191, %v191
    %v336 = vunpack.c.l.b16 %v52
    %v337 = vunpack.c.l.b16 %v53
    %v338 = vunpack.c.l.b16 %v54
    %v339 = vunpack.c.l.b16 %v55
    %v340 = vunpack.c.l.b16 %v56
    %v341 = vunpack.c.l.b16 %v57
    %v342 = vunpack.c.l.b16 %v58
    %v343 = vunpack.c.l.b16 %v59
    %v344 = vunpack.c.l.b16 %v60
    %v345 = vunpack.c.l.b16 %v61
    %v346 = vunpack.c.l.b16 %v62
    %v347 = vunpack.c.l.b16 %v63
    %v348 = vunpack.c.l.b16 %v64
    %v349 = vunpack.c.l.b16 %v65
    %v350 = vunpack.c.l.b16 %v66
    %v351 = vunpack.c.l.b16 %v67
    %v352 = vunpack.c.l.b16 %v68
    %v353 = vunpack.c.l.b16 %v69
    %v354 = vunpack.c.l.b16 %v70
    %v355 = vunpack.c.l.b16 %v71
    %v356 = vunpack.c.l.b16 %v72
    %v357 = vunpack.c.l.b16 %v73
    %v358 = vunpack.c.l.b16 %v74
    %v359 = vunpack.c.l.b16 %v75
    %v360 = vunpack.c.l.b16 %v76
    %v361 = vunpack.c.l.b16 %v77
    %v362 = vunpack.c.l.b16 %v78
    %v363 = vunpack.c.l.b16 %v79
    %v364 = vunpack.c.l.b16 %v80
    %v365 = vunpack.c.l.b16 %v81
    %v366 = vunpack.c.l.b16 %v82
    %v367 = vunpack.c.l.b16 %v83
    %v368 = vunpack.c.l.b16 %v84
    %v369 = vunpack.c.l.b16 %v85
    %v370 = vunpack.c.l.b16 %v86
    %v371 = vunpack.c.l.b16 %v87
    %v372 = vunpack.c.l.b16 %v88
    %v373 = vunpack.c.l.b16 %v89
    %v374 = vunpack.c.l.b16 %v90
    %v375 = vunpack.c.l.b16 %v91
    %v376 = vunpack.c.l.b16 %v92
    %v377 = vunpack.c.l.b16 %v93
    %v378 = vunpack.c.l.b16 %v94
    %v379 = vunpack.c.l.b16 %v95
    %v380 = vunpack.c.l.b16 %v96
    %v381 = vunpack.c.l.b16 %v97
    %v382 = vunpack.c.l.b16 %v98
    %v383 = vunpack.c.l.b16 %v99
    %v384 = vunpack.c.l.b16 %v100
    %v385 = vunpack.c.l.b16 %v101
    %v386 = vunpack.c.l.b16 %v102
    %v387 = vunpack.c.l.b16 %v103
    %v388 = vunpack.c.l.b16 %v104
    %v389 = vunpack.c.l.b16 %v105
    %v390 = vunpack.c.l.b16 %v106
    %v391 = vunpack.c.l.b16 %v107
    %v392 = vunpack.c.l.b16 %v108
    %v393 = vunpack.c.l.b16 %v109
    %v394 = vunpack.c.l.b16 %v110
    %v395 = vunpack.c.l.b16 %v111
    %v396 = vunpack.c.l.b16 %v112
    %v397 = vunpack.c.l.b16 %v113
    %v398 = vunpack.c.l.b16 %v114
    %v399 = vunpack.c.l.b16 %v115
    %v400 = vunpack.c.l.b16 %v116
    %v401 = vunpack.c.l.b16 %v117
    %v402 = vunpack.c.l.b16 %v118
    %v403 = vunpack.c.l.b16 %v119
    %v404 = vunpack.c.l.b16 %v120
    %v405 = vunpack.c.l.b16 %v121
    %v406 = vunpack.c.l.b16 %v122
    %v407 = vunpack.c.l.b16 %v123
    %v408 = vunpack.c.l.b16 %v124
    %v409 = vunpack.c.l.b16 %v125
    %v410 = vunpack.c.l.b16 %v126
    %v411 = vunpack.c.l.b16 %v127
    %v412 = vunpack.c.l.b16 %v128
    %v413 = vunpack.c.l.b16 %v129
    %v414 = vunpack.c.l.b16 %v130
    %v415 = vunpack.c.l.b16 %v131
    %v416 = vunpack.c.l.b16 %v132
    %v417 = vunpack.c.l.b16 %v133
    %v418 = vunpack.c.l.b16 %v134
    %v419 = vunpack.c.l.b16 %v135
    %v420 = vunpack.c.l.b16 %v136
    %v421 = vunpack.c.l.b16 %v137
    %v422 = vunpack.c.l.b16 %v138
    %v423 = vunpack.c.l.b16 %v139
    %v424 = vunpack.c.l.b16 %v140
    %v425 = vunpack.c.l.b16 %v141
    %v426 = vunpack.c.l.b16 %v142
    %v427 = vunpack.c.l.b16 %v143
    %v428 = vunpack.c.l.b16 %v144
    %v429 = vunpack.c.l.b16 %v145
    %v430 = vunpack.c.l.b16 %v146
    %v431 = vunpack.c.l.b16 %v147
    %v432 = vunpack.c.l.b16 %v148
    %v433 = vunpack.c.l.b16 %v149
    %v434 = vunpack.c.l.b16 %v150
    %v435 = vunpack.c.l.b16 %v151
    %v436 = vunpack.c.l.b16 %v152
    %v437 = vunpack.c.l.b16 %v153
    %v438 = vunpack.c.l.b16 %v154
    %v439 = vunpack.c.l.b16 %v155
    %v440 = vunpack.c.l.b16 %v156
    %v441 = vunpack.c.l.b16 %v157
    %v442 = vunpack.c.l.b16 %v158
    %v443 = vunpack.c.l.b16 %v159
    %v444 = vunpack.c.l.b16 %v160
    %v445 = vunpack.c.l.b16 %v161
    %v446 = vunpack.c.l.b16 %v162
    %v447 = vunpack.c.l.b16 %v163
    %v448 = vunpack.c.l.b16 %v164
    %v449 = vunpack.c.l.b16 %v165
    %v450 = vunpack.c.l.b16 %v166
    %v451 = vunpack.c.l.b16 %v167
    %v452 = vunpack.c.l.b16 %v168
    %v453 = vunpack.c.l.b16 %v169
    %v454 = vunpack.c.l.b16 %v170
    %v455 = vunpack.c.l.b16 %v171
    %v456 = vunpack.c.l.b16 %v172
    %v457 = vunpack.c.l.b16 %v173
    %v458 = vunpack.c.l.b16 %v174
    %v459 = vunpack.c.l.b16 %v175
    %v460 = vunpack.c.l.b16 %v176
    %v461 = vunpack.c.l.b16 %v177
    %v462 = vunpack.c.l.b16 %v178
    %v463 = vunpack.c.l.b16 %v179
    %v464 = vpack.c.b16 %v337, %v336
    %v465 = vpack.c.b16 %v339, %v338
    %v466 = vpack.c.b16 %v341, %v340
    %v467 = vpack.c.b16 %v343, %v342
    %v468 = vpack.c.b16 %v345, %v344
    %v469 = vpack.c.b16 %v347, %v346
    %v470 = vpack.c.b16 %v349, %v348
    %v471 = vpack.c.b16 %v351, %v350
    %v472 = vpack.c.b16 %v353, %v352
    %v473 = vpack.c.b16 %v355, %v354
    %v474 = vpack.c.b16 %v357, %v356
    %v475 = vpack.c.b16 %v359, %v358
    %v476 = vpack.c.b16 %v361, %v360
    %v477 = vpack.c.b16 %v363, %v362
    %v478 = vpack.c.b16 %v365, %v364
    %v479 = vpack.c.b16 %v367, %v366
    %v480 = vpack.c.b16 %v369, %v368
    %v481 = vpack.c.b16 %v371, %v370
    %v482 = vpack.c.b16 %v373, %v372
    %v483 = vpack.c.b16 %v375, %v374
    %v484 = vpack.c.b16 %v377, %v376
    %v485 = vpack.c.b16 %v379, %v378
    %v486 = vpack.c.b16 %v381, %v380
    %v487 = vpack.c.b16 %v383, %v382
    %v488 = vpack.c.b16 %v385, %v384
    %v489 = vpack.c.b16 %v387, %v386
    %v490 = vpack.c.b16 %v389, %v388
    %v491 = vpack.c.b16 %v391, %v390
    %v492 = vpack.c.b16 %v393, %v392
    %v493 = vpack.c.b16 %v395, %v394
    %v494 = vpack.c.b16 %v397, %v396
    %v495 = vpack.c.b16 %v399, %v398
    %v496 = vpack.c.b16 %v401, %v400
    %v497 = vpack.c.b16 %v403, %v402
    %v498 = vpack.c.b16 %v405, %v404
    %v499 = vpack.c.b16 %v407, %v406
    %v500 = vpack.c.b16 %v409, %v408
    %v501 = vpack.c.b16 %v411, %v410
    %v502 = vpack.c.b16 %v413, %v412
    %v503 = vpack.c.b16 %v415, %v414
    %v504 = vpack.c.b16 %v417, %v416
    %v505 = vpack.c.b16 %v419, %v418
    %v506 = vpack.c.b16 %v421, %v420
    %v507 = vpack.c.b16 %v423, %v422
    %v508 = vpack.c.b16 %v425, %v424
    %v509 = vpack.c.b16 %v427, %v426
    %v510 = vpack.c.b16 %v429, %v428
    %v511 = vpack.c.b16 %v431, %v430
    %v512 = vpack.c.b16 %v433, %v432
    %v513 = vpack.c.b16 %v435, %v434
    %v514 = vpack.c.b16 %v437, %v436
    %v515 = vpack.c.b16 %v439, %v438
    %v516 = vpack.c.b16 %v441, %v440
    %v517 = vpack.c.b16 %v443, %v442
    %v518 = vpack.c.b16 %v445, %v444
    %v519 = vpack.c.b16 %v447, %v446
    %v520 = vpack.c.b16 %v449, %v448
    %v521 = vpack.c.b16 %v451, %v450
    %v522 = vpack.c.b16 %v453, %v452
    %v523 = vpack.c.b16 %v455, %v454
    %v524 = vpack.c.b16 %v457, %v456
    %v525 = vpack.c.b16 %v459, %v458
    %v526 = vpack.c.b16 %v461, %v460
    %v527 = vpack.c.b16 %v463, %v462
    %592 = vmatprep.subr.bf16.mxu0 0
    %593 = vmatpush1.bf16.msra.mxu0 %v471
    %594 = vmatprep.subr.bf16.mxu0 0
    %595 = vmatpush1.bf16.msra.mxu0 %v470
    %596 = vmatprep.subr.bf16.mxu0 0
    %597 = vmatpush1.bf16.msra.mxu0 %v469
    %598 = vmatprep.subr.bf16.mxu0 0
    %599 = vmatpush1.bf16.msra.mxu0 %v468
    %600 = vmatprep.subr.bf16.mxu0 0
    %601 = vmatpush1.bf16.msra.mxu0 %v467
    %602 = vmatprep.subr.bf16.mxu0 0
    %603 = vmatpush1.bf16.msra.mxu0 %v466
    %604 = vmatprep.subr.bf16.mxu0 0
    %605 = vmatpush1.bf16.msra.mxu0 %v465
    %606 = vmatprep.subr.bf16.mxu0 0
    %607 = vmatpush1.bf16.msra.mxu0 %v464
    %608 = vmatprep.subr.bf16.mxu0 0
    %609 = vmatpush2.bf16.msra.mxu0 %v479
    %610 = vmatprep.subr.bf16.mxu0 0
    %611 = vmatpush2.bf16.msra.mxu0 %v478
    %612 = vmatprep.subr.bf16.mxu0 0
    %613 = vmatpush2.bf16.msra.mxu0 %v477
    %614 = vmatprep.subr.bf16.mxu0 0
    %615 = vmatpush2.bf16.msra.mxu0 %v476
    %616 = vmatprep.subr.bf16.mxu0 0
    %617 = vmatpush2.bf16.msra.mxu0 %v475
    %618 = vmatprep.subr.bf16.mxu0 0
    %619 = vmatpush2.bf16.msra.mxu0 %v474
    %620 = vmatprep.subr.bf16.mxu0 0
    %621 = vmatpush2.bf16.msra.mxu0 %v473
    %622 = vmatprep.subr.bf16.mxu0 0
    %623 = vmatpush2.bf16.msra.mxu0 %v472
    %624 = vmatprep.mubr.bf16.mxu0 %v193
    %625 = vmatmul.mubr.bf16.gmra.mxu0 %v192
    %v626 = vpop.f32.mrf.mxu0
    %v627 = vadd.f32 0.0, %v626
    %v628 = vpop.f32.mrf.mxu0
    %v629 = vpop.f32.mrf.mxu0
    %v630 = vpop.f32.mrf.mxu0
    %631 = vdwg.mxu0
    %632 = vmatprep.subr.bf16.mxu0 0
    %633 = vmatpush1.bf16.msra.mxu0 %v487
    %634 = vmatprep.subr.bf16.mxu0 0
    %635 = vmatpush1.bf16.msra.mxu0 %v486
    %636 = vmatprep.subr.bf16.mxu0 0
    %637 = vmatpush1.bf16.msra.mxu0 %v485
    %638 = vmatprep.subr.bf16.mxu0 0
    %639 = vmatpush1.bf16.msra.mxu0 %v484
    %640 = vmatprep.subr.bf16.mxu0 0
    %641 = vmatpush1.bf16.msra.mxu0 %v483
    %642 = vmatprep.subr.bf16.mxu0 0
    %643 = vmatpush1.bf16.msra.mxu0 %v482
    %644 = vmatprep.subr.bf16.mxu0 0
    %645 = vmatpush1.bf16.msra.mxu0 %v481
    %646 = vmatprep.subr.bf16.mxu0 0
    %647 = vmatpush1.bf16.msra.mxu0 %v480
    %648 = vmatprep.subr.bf16.mxu0 0
    %649 = vmatpush2.bf16.msra.mxu0 %v495
    %650 = vmatprep.subr.bf16.mxu0 0
    %651 = vmatpush2.bf16.msra.mxu0 %v494
    %652 = vmatprep.subr.bf16.mxu0 0
    %653 = vmatpush2.bf16.msra.mxu0 %v493
    %654 = vmatprep.subr.bf16.mxu0 0
    %655 = vmatpush2.bf16.msra.mxu0 %v492
    %656 = vmatprep.subr.bf16.mxu0 0
    %657 = vmatpush2.bf16.msra.mxu0 %v491
    %658 = vmatprep.subr.bf16.mxu0 0
    %659 = vmatpush2.bf16.msra.mxu0 %v490
    %660 = vmatprep.subr.bf16.mxu0 0
    %661 = vmatpush2.bf16.msra.mxu0 %v489
    %662 = vmatprep.subr.bf16.mxu0 0
    %663 = vmatpush2.bf16.msra.mxu0 %v488
    %664 = vmatprep.mubr.bf16.mxu0 %v195
    %665 = vmatmul.mubr.bf16.gmra.mxu0 %v194
    %v666 = vpop.f32.mrf.mxu0
    %v667 = vadd.f32 %v627, %v666
    %v668 = vpop.f32.mrf.mxu0
    %v669 = vpop.f32.mrf.mxu0
    %v670 = vpop.f32.mrf.mxu0
    %671 = vdwg.mxu0
    %672 = vmatprep.subr.bf16.mxu0 0
    %673 = vmatpush1.bf16.msra.mxu0 %v503
    %674 = vmatprep.subr.bf16.mxu0 0
    %675 = vmatpush1.bf16.msra.mxu0 %v502
    %676 = vmatprep.subr.bf16.mxu0 0
    %677 = vmatpush1.bf16.msra.mxu0 %v501
    %678 = vmatprep.subr.bf16.mxu0 0
    %679 = vmatpush1.bf16.msra.mxu0 %v500
    %680 = vmatprep.subr.bf16.mxu0 0
    %681 = vmatpush1.bf16.msra.mxu0 %v499
    %682 = vmatprep.subr.bf16.mxu0 0
    %683 = vmatpush1.bf16.msra.mxu0 %v498
    %684 = vmatprep.subr.bf16.mxu0 0
    %685 = vmatpush1.bf16.msra.mxu0 %v497
    %686 = vmatprep.subr.bf16.mxu0 0
    %687 = vmatpush1.bf16.msra.mxu0 %v496
    %688 = vmatprep.subr.bf16.mxu0 0
    %689 = vmatpush2.bf16.msra.mxu0 %v511
    %690 = vmatprep.subr.bf16.mxu0 0
    %691 = vmatpush2.bf16.msra.mxu0 %v510
    %692 = vmatprep.subr.bf16.mxu0 0
    %693 = vmatpush2.bf16.msra.mxu0 %v509
    %694 = vmatprep.subr.bf16.mxu0 0
    %695 = vmatpush2.bf16.msra.mxu0 %v508
    %696 = vmatprep.subr.bf16.mxu0 0
    %697 = vmatpush2.bf16.msra.mxu0 %v507
    %698 = vmatprep.subr.bf16.mxu0 0
    %699 = vmatpush2.bf16.msra.mxu0 %v506
    %700 = vmatprep.subr.bf16.mxu0 0
    %701 = vmatpush2.bf16.msra.mxu0 %v505
    %702 = vmatprep.subr.bf16.mxu0 0
    %703 = vmatpush2.bf16.msra.mxu0 %v504
    %704 = vmatprep.mubr.bf16.mxu0 %v197
    %705 = vmatmul.mubr.bf16.gmra.mxu0 %v196
    %v706 = vpop.f32.mrf.mxu0
    %v707 = vadd.f32 %v667, %v706
    %v708 = vpop.f32.mrf.mxu0
    %v709 = vpop.f32.mrf.mxu0
    %v710 = vpop.f32.mrf.mxu0
    %711 = vdwg.mxu0
    %712 = vmatprep.subr.bf16.mxu0 0
    %713 = vmatpush1.bf16.msra.mxu0 %v519
    %714 = vmatprep.subr.bf16.mxu0 0
    %715 = vmatpush1.bf16.msra.mxu0 %v518
    %716 = vmatprep.subr.bf16.mxu0 0
    %717 = vmatpush1.bf16.msra.mxu0 %v517
    %718 = vmatprep.subr.bf16.mxu0 0
    %719 = vmatpush1.bf16.msra.mxu0 %v516
    %720 = vmatprep.subr.bf16.mxu0 0
    %721 = vmatpush1.bf16.msra.mxu0 %v515
    %722 = vmatprep.subr.bf16.mxu0 0
    %723 = vmatpush1.bf16.msra.mxu0 %v514
    %724 = vmatprep.subr.bf16.mxu0 0
    %725 = vmatpush1.bf16.msra.mxu0 %v513
    %726 = vmatprep.subr.bf16.mxu0 0
    %727 = vmatpush1.bf16.msra.mxu0 %v512
    %728 = vmatprep.subr.bf16.mxu0 0
    %729 = vmatpush2.bf16.msra.mxu0 %v527
    %730 = vmatprep.subr.bf16.mxu0 0
    %731 = vmatpush2.bf16.msra.mxu0 %v526
    %732 = vmatprep.subr.bf16.mxu0 0
    %733 = vmatpush2.bf16.msra.mxu0 %v525
    %734 = vmatprep.subr.bf16.mxu0 0
    %735 = vmatpush2.bf16.msra.mxu0 %v524
    %736 = vmatprep.subr.bf16.mxu0 0
    %737 = vmatpush2.bf16.msra.mxu0 %v523
    %738 = vmatprep.subr.bf16.mxu0 0
    %739 = vmatpush2.bf16.msra.mxu0 %v522
    %740 = vmatprep.subr.bf16.mxu0 0
    %741 = vmatpush2.bf16.msra.mxu0 %v521
    %742 = vmatprep.subr.bf16.mxu0 0
    %743 = vmatpush2.bf16.msra.mxu0 %v520
    %744 = vmatprep.mubr.bf16.mxu0 %v199
    %745 = vmatmul.mubr.bf16.gmra.mxu0 %v198
    %v746 = vpop.f32.mrf.mxu0
    %v747 = vadd.f32 %v707, %v746
    %v748 = vpop.f32.mrf.mxu0
    %v749 = vpop.f32.mrf.mxu0
    %v750 = vpop.f32.mrf.mxu0
    %751 = vdwg.mxu0
    %v752 = vadd.f32 %v47, %v747
    %753 = vst [vmem:[#allocation2] sm:$0xff] %v752
    // Predicated region
    $region26: #{tpu_custom_call.1} parent=1 // pred_check
      %p754 = pneg %p42
    $region27: #{tpu_custom_call.1} parent=1 // pred_check_branch
      %756 = sbr.rel (%p754) target = $region29
    $region28: #{tpu_custom_call.1} parent=1 // pred_region
      %v757 = vld [vmem:[%s2] sm:$0x1]
      %v758 = vlaneseq
      %v759 = vand.u32 %v758, 127
      %v760 = vld [vmem:[#allocation2] sm:$0xff]
      %v762 = vlaneseq
      %v763 = vshrl.u32 %v762, 7
      %v764 = vsub.s32 0, %v763
      %v765 = vrot.slane %v757, %v764
      %v767 = vadd.f32 %v760, %v765
      %vm768 = vcmp.ge.s32.totalorder %v759, 0
      %vm769 = vcmp.lt.s32.totalorder %v759, 10
      %vm770 = vmand %vm768, %vm769
      %v771 = vsel %vm770, %v767, -1e+30
      %772 = vmax.xlane.f32.xlu0 %v771
      %v773 = vpop.xlane.xlu0 %772
      %v774 = vsel %vm770, %v773, 0.0
      %vm775 = vcmp.ge.s32.totalorder %v759, 10
      %vm776 = vcmp.lt.s32.totalorder %v759, 20
      %vm777 = vmand %vm775, %vm776
      %v778 = vsel %vm777, %v767, -1e+30
      %779 = vmax.xlane.f32.xlu0 %v778
      %v780 = vpop.xlane.xlu0 %779
      %v781 = vsel %vm777, %v780, %v774
      %vm782 = vcmp.ge.s32.totalorder %v759, 20
      %vm783 = vcmp.lt.s32.totalorder %v759, 30
      %vm784 = vmand %vm782, %vm783
      %v785 = vsel %vm784, %v767, -1e+30
      %786 = vmax.xlane.f32.xlu0 %v785
      %v787 = vpop.xlane.xlu0 %786
      %v788 = vsel %vm784, %v787, %v781
      %v789 = vsub.f32 %v767, %v788
      %v790 = vmul.f32 %v789, 1.442695
      %v791 = vpow.pop %v790
      %v792 = vsel %vm770, %v791, 0.0
      %793 = vadd.xlane.f32.xlu0 %v792
      %v794 = vpop.xlane.xlu0 %793
      %v795 = vsel %vm770, %v794, 1.0
      %v796 = vsel %vm777, %v791, 0.0
      %797 = vadd.xlane.f32.xlu0 %v796
      %v798 = vpop.xlane.xlu0 %797
      %v799 = vsel %vm777, %v798, %v795
      %v800 = vsel %vm784, %v791, 0.0
      %801 = vadd.xlane.f32.xlu0 %v800
      %v802 = vpop.xlane.xlu0 %801
      %v803 = vsel %vm784, %v802, %v799
      %v804 = vrcp.pop %v803
      %v805 = vmul.f32 %v791, %v804
      %806 = vst [vmem:[#allocation8] sm:$0xff] %v805
    $region29: #{tpu_custom_call.1} parent=1 // pred_fallthru
      _
    // Predicated region
    $region30: #{tpu_custom_call.1} parent=1 // pred_check
      _
    $region31: #{tpu_custom_call.1} parent=1 // pred_check_branch
      %808 = sbr.rel (0) target = $region33
    $region32: #{tpu_custom_call.1} parent=1 // pred_region
      %s810 = ssub.s32 128, 128
      %811 = vsyncadd [#allocation5], %s810
      %s813 = sshll.u32 [#allocation8], 4
      %s814 = int_to_ptr.vmem [resolvable:$true] %s813
      %816 = dma.vmem_to_hbm [thread:$0]  %s814, 128, %s3, [#allocation5]
    $region33: #{tpu_custom_call.1} parent=1 // pred_fallthru
      _
    // Predicated region
    $region34: #{tpu_custom_call.1} parent=1 // pred_check
      _
    $region35: #{tpu_custom_call.1} parent=1 // pred_check_branch
      %818 = sbr.rel (0) target = $region37
    $region36: #{tpu_custom_call.1} parent=1 // pred_region
      %819 = dma.done [#allocation5], 128
    $region37: #{tpu_custom_call.1} parent=1 // pred_fallthru
      _
    %820 = vsyncpa [#allocation4], 1
    %821 = vsyncpa [#allocation7], 1
    %822 = vsyncpa [#allocation5], 1

</llo_original>
